<compile_context>
chip_gen: v7x
topology: tpu7x:2x2x1
jax: 0.10.0
libtpu: 0.0.40
codegen_flags: <defaults>
</compile_context>

<pallas_src>
import jax
import jax.numpy as jnp
import numpy as np
from jax import lax
from jax.experimental import pallas as pl
from jax.experimental.pallas import tpu as pltpu

NUM_NODES = 5
LANES = 128


def _propagate(h):
    """N @ h for the fixed 5-node star graph (node 0 is the hub).

    N[i, j] = 0.5 iff exactly one of (i, j) is node 0.  Rank-2 structure ->
    one sublane reduce + broadcast/select; no MXU matmul, no adjacency data.
    """
    h0 = h[0:1, :]
    rest = jnp.sum(h, axis=0, keepdims=True) - h0          # sum over nodes 1..4
    rows = lax.broadcasted_iota(jnp.int32, h.shape, 0)
    return jnp.where(rows == 0, 0.5 * rest, 0.5 * h0)


def _make_kernel(num_feat, h1, h2, n_nodes):
    # Static row offsets into the packed parameter slab (trace-time constants).
    r_w1 = 0
    r_w2 = r_w1 + num_feat
    r_w3 = r_w2 + h1
    r_b = r_w3 + n_nodes * h2

    def kernel(x_ref, w_ref, o_ref):
        x = x_ref[0]                                         # (5, F)

        # GraphConv 1: relu(N @ (X @ W1) + b1), computed at full 128-lane
        # width (padded lanes of W1/b1 are zero; relu keeps them zero).
        h = jnp.dot(x, w_ref[r_w1:r_w1 + num_feat, :],
                    preferred_element_type=jnp.float32)      # (5, 128)
        h = _propagate(h)
        h = jnp.maximum(h + w_ref[r_b:r_b + 1, :], 0.0)

        # GraphConv 2: relu(N @ (H @ W2) + b2).
        h = jnp.dot(h[:, :h1], w_ref[r_w2:r_w2 + h1, :],
                    preferred_element_type=jnp.float32)      # (5, 128)
        h = _propagate(h)
        h = jnp.maximum(h + w_ref[r_b + 1:r_b + 2, :], 0.0)

        # Flatten (node-major) via lane-axis concat of the 5 node rows, then
        # the final Linear as ONE (1, 5*h2) @ (5*h2, 128) MXU matmul against
        # the resident pre-transposed, lane-padded W3 -> lane-dense store.
        h_flat = jnp.concatenate([h[i:i + 1, :h2] for i in range(n_nodes)],
                                 axis=1)                     # (1, 5*h2)
        out = jnp.dot(h_flat, w_ref[r_w3:r_w3 + n_nodes * h2, :],
                      preferred_element_type=jnp.float32)    # (1, 128)
        o_ref[0] = out + w_ref[r_b + 2:r_b + 3, :]

    return kernel


def _pack_params(w1, b1, w2, b2, w3, b3):
    """Pack all parameters into one lane-padded (rows, 128) f32 slab (1 DMA)."""
    num_feat, h1 = w1.shape
    h2 = w2.shape[1]
    num_classes = b3.shape[-1]
    assert w3.shape == (num_classes, NUM_NODES * h2)
    assert max(num_feat, h1, h2, num_classes) <= LANES

    r_w2 = num_feat
    r_w3 = r_w2 + h1
    r_b = r_w3 + NUM_NODES * h2
    rows = ((r_b + 3 + 7) // 8) * 8                          # (208, 128) here

    slab = jnp.zeros((rows, LANES), jnp.float32)
    slab = slab.at[0:num_feat, :h1].set(w1.astype(jnp.float32))
    slab = slab.at[r_w2:r_w2 + h1, :h2].set(w2.astype(jnp.float32))
    slab = slab.at[r_w3:r_w3 + NUM_NODES * h2, :num_classes].set(
        jnp.transpose(w3).astype(jnp.float32))
    slab = slab.at[r_b, :h1].set(b1.astype(jnp.float32))
    slab = slab.at[r_b + 1, :h2].set(b2.astype(jnp.float32))
    slab = slab.at[r_b + 2, :num_classes].set(b3.astype(jnp.float32))
    return slab


@jax.jit
def gcn_forward_batched(xb, w1, b1, w2, b2, w3, b3):
    """xb: (B, 5, num_feat) -> (B, num_classes); same fixed graph per element."""
    batch = xb.shape[0]
    num_feat, h1 = w1.shape
    h2 = w2.shape[1]
    num_classes = b3.shape[-1]
    assert xb.shape[1:] == (NUM_NODES, num_feat)

    slab = _pack_params(w1, b1, w2, b2, w3, b3)
    kernel = _make_kernel(num_feat, h1, h2, NUM_NODES)

    # Advisory cost hint: tiny custom call, let XLA schedule neighbors around it.
    flops = 2 * batch * NUM_NODES * LANES * (num_feat + h1 + h2)
    bytes_accessed = 4 * (slab.size + xb.size + batch * LANES)

    out = pl.pallas_call(
        kernel,
        out_shape=jax.ShapeDtypeStruct((batch, 1, LANES), jnp.float32),
        grid=(batch,),
        in_specs=[
            # Per-step (1, 5, F) X tile, pipelined over the batch axis.
            pl.BlockSpec((1, NUM_NODES, num_feat), lambda b: (b, 0, 0)),
            # Packed parameter slab: constant index_map -> DMA'd once, resident.
            pl.BlockSpec(slab.shape, lambda b: (0, 0)),
        ],
        out_specs=pl.BlockSpec((1, 1, LANES), lambda b: (b, 0, 0)),
        compiler_params=pltpu.CompilerParams(
            dimension_semantics=("parallel",)),
        cost_estimate=pl.CostEstimate(flops=flops, transcendentals=0,
                                      bytes_accessed=bytes_accessed),
    )(xb.astype(jnp.float32), slab)
    return out[:, 0, :num_classes]                            # (B, num_classes)


def gcn_forward(x, w1, b1, w2, b2, w3, b3):
    """Single-graph forward matching the original module: x (5, num_feat)."""
    return gcn_forward_batched(x[None], w1, b1, w2, b2, w3, b3)[0]


def build_norm_adj():
    src = np.array([0, 0, 0, 0, 1, 2, 3, 4])
    dst = np.array([2, 1, 3, 4, 0, 0, 0, 0])
    a = np.zeros((NUM_NODES, NUM_NODES), dtype=np.float32)
    a[src, dst] = 1.0
    out_deg = np.maximum(a.sum(axis=1), 1.0)
    in_deg = np.maximum(a.sum(axis=0), 1.0)
    # N = D_in^{-1/2} A^T D_out^{-1/2}
    n = (in_deg ** -0.5)[:, None] * a.T * (out_deg ** -0.5)[None, :]
    return jnp.asarray(n, dtype=jnp.float32)


def reference(norm_adj, x, w1, b1, w2, b2, w3, b3):
    h = jnp.maximum(norm_adj @ (x @ w1) + b1, 0.0)
    h = jnp.maximum(norm_adj @ (h @ w2) + b2, 0.0)
    return h.reshape(-1) @ w3.T + b3


if __name__ == "__main__":
    num_feat, num_hidden, num_hidden1, num_classes = 8, 32, 32, 8
    batch = 8

    key = jax.random.PRNGKey(0)
    kx, kxb, k1, k2, k3, kb1, kb2, kb3 = jax.random.split(key, 8)

    x = jax.random.normal(kx, (NUM_NODES, num_feat), dtype=jnp.float32)
    xb = jax.random.normal(kxb, (batch, NUM_NODES, num_feat), dtype=jnp.float32)
    w1 = jax.random.normal(k1, (num_feat, num_hidden), dtype=jnp.float32) * 0.1
    b1 = jax.random.normal(kb1, (num_hidden,), dtype=jnp.float32) * 0.1
    w2 = jax.random.normal(k2, (num_hidden, num_hidden1), dtype=jnp.float32) * 0.1
    b2 = jax.random.normal(kb2, (num_hidden1,), dtype=jnp.float32) * 0.1
    w3 = jax.random.normal(
        k3, (num_classes, NUM_NODES * num_hidden1), dtype=jnp.float32) * 0.1
    b3 = jax.random.normal(kb3, (num_classes,), dtype=jnp.float32) * 0.1

    # Single-graph forward (original module semantics).
    out1 = gcn_forward(x, w1, b1, w2, b2, w3, b3)
    # Batched forward (batch grid, resident weights, parallel semantics).
    outb = gcn_forward_batched(xb, w1, b1, w2, b2, w3, b3)
    jax.block_until_ready((out1, outb))

    norm_adj = build_norm_adj()   # generic construction checks the baked graph
    ref1 = reference(norm_adj, x, w1, b1, w2, b2, w3, b3)
    np.testing.assert_allclose(np.asarray(out1), np.asarray(ref1),
                               rtol=1e-5, atol=1e-5)
    refb = jnp.stack([reference(norm_adj, xb[i], w1, b1, w2, b2, w3, b3)
                      for i in range(batch)])
    np.testing.assert_allclose(np.asarray(outb), np.asarray(refb),
                               rtol=1e-5, atol=1e-5)
    print("KERNEL_OK")
</pallas_src>

<mosaic_0001>
module attributes {stable_mosaic.version = 11 : i64} {
  func.func @kernel(%arg0: i32, %arg1: memref<1x5x8xf32, #tpu.memory_space<vmem>>, %arg2: memref<208x128xf32, #tpu.memory_space<vmem>>, %arg3: memref<1x1x128xf32, #tpu.memory_space<vmem>>) attributes {dimension_semantics = [#tpu.dimension_semantics<parallel>], iteration_bounds = array<i64: 1>, scalar_prefetch = 0 : i64, scratch_operands = 0 : i64, tpu.core_type = #tpu.core_type<tc>, window_params = [{transform_indices = @transform_0, window_bounds = array<i64: 1, 5, 8>}, {pipeline_mode = #tpu.pipeline_mode<synchronous>, transform_indices = @transform_1, window_bounds = array<i64: 208, 128>}, {transform_indices = @transform_2, window_bounds = array<i64: 1, 1, 128>}]} {
    %c0 = arith.constant 0 : index
    %c0_0 = arith.constant 0 : index
    %c0_1 = arith.constant 0 : index
    %0 = vector.load %arg1[%c0, %c0_0, %c0_1] : memref<1x5x8xf32, #tpu.memory_space<vmem>>, vector<1x5x8xf32>
    %1 = vector.shape_cast %0 : vector<1x5x8xf32> to vector<5x8xf32>
    %c0_2 = arith.constant 0 : index
    %c0_3 = arith.constant 0 : index
    %2 = vector.load %arg2[%c0_2, %c0_3] : memref<208x128xf32, #tpu.memory_space<vmem>>, vector<8x128xf32>
    %cst = arith.constant dense<0.000000e+00> : vector<5x128xf32>
    %3 = tpu.matmul %1, %2, %cst {dimension_numbers = #tpu.dot_dimension_numbers<[1], [0], [0], [1], [0, 0, 1, 1], [], []>} : vector<5x8xf32>, vector<8x128xf32>, vector<5x128xf32> -> vector<5x128xf32>
    %4 = vector.extract_strided_slice %3 {offsets = [0, 0], sizes = [1, 128], strides = [1, 1]} : vector<5x128xf32> to vector<1x128xf32>
    %cst_4 = arith.constant dense<0.000000e+00> : vector<128xf32>
    %5 = vector.multi_reduction <add>, %3, %cst_4 [0] : vector<5x128xf32> to vector<128xf32>
    %6 = vector.shape_cast %5 : vector<128xf32> to vector<1x128xf32>
    %7 = arith.subf %6, %4 : vector<1x128xf32>
    %8 = tpu.iota {dimensions = array<i32: 0>} : vector<5x128xi32>
    %c0_i32 = arith.constant 0 : i32
    %9 = vector.broadcast %c0_i32 : i32 to vector<5x128xi32>
    %10 = arith.cmpi eq, %8, %9 : vector<5x128xi32>
    %cst_5 = arith.constant 5.000000e-01 : f32
    %11 = vector.broadcast %cst_5 : f32 to vector<1x128xf32>
    %12 = arith.mulf %11, %7 : vector<1x128xf32>
    %cst_6 = arith.constant 5.000000e-01 : f32
    %13 = vector.broadcast %cst_6 : f32 to vector<1x128xf32>
    %14 = arith.mulf %13, %4 : vector<1x128xf32>
    %15 = vector.shape_cast %12 : vector<1x128xf32> to vector<1x128xf32>
    %16 = vector.broadcast %15 : vector<1x128xf32> to vector<5x128xf32>
    %17 = vector.shape_cast %14 : vector<1x128xf32> to vector<1x128xf32>
    %18 = vector.broadcast %17 : vector<1x128xf32> to vector<5x128xf32>
    %19 = arith.select %10, %16, %18 : vector<5x128xi1>, vector<5x128xf32>
    %c200 = arith.constant 200 : index
    %c0_7 = arith.constant 0 : index
    %20 = vector.load %arg2[%c200, %c0_7] : memref<208x128xf32, #tpu.memory_space<vmem>>, vector<1x128xf32>
    %21 = vector.broadcast %20 : vector<1x128xf32> to vector<5x128xf32>
    %22 = arith.addf %19, %21 : vector<5x128xf32>
    %cst_8 = arith.constant 0.000000e+00 : f32
    %23 = vector.broadcast %cst_8 : f32 to vector<5x128xf32>
    %24 = arith.maximumf %22, %23 : vector<5x128xf32>
    %25 = vector.extract_strided_slice %24 {offsets = [0, 0], sizes = [5, 32], strides = [1, 1]} : vector<5x128xf32> to vector<5x32xf32>
    %c8 = arith.constant 8 : index
    %c0_9 = arith.constant 0 : index
    %26 = vector.load %arg2[%c8, %c0_9] : memref<208x128xf32, #tpu.memory_space<vmem>>, vector<32x128xf32>
    %cst_10 = arith.constant dense<0.000000e+00> : vector<5x128xf32>
    %27 = tpu.matmul %25, %26, %cst_10 {dimension_numbers = #tpu.dot_dimension_numbers<[1], [0], [0], [1], [0, 0, 1, 1], [], []>} : vector<5x32xf32>, vector<32x128xf32>, vector<5x128xf32> -> vector<5x128xf32>
    %28 = vector.extract_strided_slice %27 {offsets = [0, 0], sizes = [1, 128], strides = [1, 1]} : vector<5x128xf32> to vector<1x128xf32>
    %cst_11 = arith.constant dense<0.000000e+00> : vector<128xf32>
    %29 = vector.multi_reduction <add>, %27, %cst_11 [0] : vector<5x128xf32> to vector<128xf32>
    %30 = vector.shape_cast %29 : vector<128xf32> to vector<1x128xf32>
    %31 = arith.subf %30, %28 : vector<1x128xf32>
    %32 = tpu.iota {dimensions = array<i32: 0>} : vector<5x128xi32>
    %c0_i32_12 = arith.constant 0 : i32
    %33 = vector.broadcast %c0_i32_12 : i32 to vector<5x128xi32>
    %34 = arith.cmpi eq, %32, %33 : vector<5x128xi32>
    %cst_13 = arith.constant 5.000000e-01 : f32
    %35 = vector.broadcast %cst_13 : f32 to vector<1x128xf32>
    %36 = arith.mulf %35, %31 : vector<1x128xf32>
    %cst_14 = arith.constant 5.000000e-01 : f32
    %37 = vector.broadcast %cst_14 : f32 to vector<1x128xf32>
    %38 = arith.mulf %37, %28 : vector<1x128xf32>
    %39 = vector.shape_cast %36 : vector<1x128xf32> to vector<1x128xf32>
    %40 = vector.broadcast %39 : vector<1x128xf32> to vector<5x128xf32>
    %41 = vector.shape_cast %38 : vector<1x128xf32> to vector<1x128xf32>
    %42 = vector.broadcast %41 : vector<1x128xf32> to vector<5x128xf32>
    %43 = arith.select %34, %40, %42 : vector<5x128xi1>, vector<5x128xf32>
    %c201 = arith.constant 201 : index
    %c0_15 = arith.constant 0 : index
    %44 = vector.load %arg2[%c201, %c0_15] : memref<208x128xf32, #tpu.memory_space<vmem>>, vector<1x128xf32>
    %45 = vector.broadcast %44 : vector<1x128xf32> to vector<5x128xf32>
    %46 = arith.addf %43, %45 : vector<5x128xf32>
    %cst_16 = arith.constant 0.000000e+00 : f32
    %47 = vector.broadcast %cst_16 : f32 to vector<5x128xf32>
    %48 = arith.maximumf %46, %47 : vector<5x128xf32>
    %49 = vector.extract_strided_slice %48 {offsets = [0, 0], sizes = [1, 32], strides = [1, 1]} : vector<5x128xf32> to vector<1x32xf32>
    %50 = vector.extract_strided_slice %48 {offsets = [1, 0], sizes = [1, 32], strides = [1, 1]} : vector<5x128xf32> to vector<1x32xf32>
    %51 = vector.extract_strided_slice %48 {offsets = [2, 0], sizes = [1, 32], strides = [1, 1]} : vector<5x128xf32> to vector<1x32xf32>
    %52 = vector.extract_strided_slice %48 {offsets = [3, 0], sizes = [1, 32], strides = [1, 1]} : vector<5x128xf32> to vector<1x32xf32>
    %53 = vector.extract_strided_slice %48 {offsets = [4, 0], sizes = [1, 32], strides = [1, 1]} : vector<5x128xf32> to vector<1x32xf32>
    %54 = tpu.concatenate %49, %50, %51, %52, %53 in 1 : vector<1x32xf32>, vector<1x32xf32>, vector<1x32xf32>, vector<1x32xf32>, vector<1x32xf32> -> vector<1x160xf32>
    %c40 = arith.constant 40 : index
    %c0_17 = arith.constant 0 : index
    %55 = vector.load %arg2[%c40, %c0_17] : memref<208x128xf32, #tpu.memory_space<vmem>>, vector<160x128xf32>
    %cst_18 = arith.constant dense<0.000000e+00> : vector<1x128xf32>
    %56 = tpu.matmul %54, %55, %cst_18 {dimension_numbers = #tpu.dot_dimension_numbers<[1], [0], [0], [1], [0, 0, 1, 1], [], []>} : vector<1x160xf32>, vector<160x128xf32>, vector<1x128xf32> -> vector<1x128xf32>
    %c202 = arith.constant 202 : index
    %c0_19 = arith.constant 0 : index
    %57 = vector.load %arg2[%c202, %c0_19] : memref<208x128xf32, #tpu.memory_space<vmem>>, vector<1x128xf32>
    %58 = arith.addf %56, %57 : vector<1x128xf32>
    %c0_20 = arith.constant 0 : index
    %c0_21 = arith.constant 0 : index
    %c0_22 = arith.constant 0 : index
    %59 = vector.load %arg3[%c0_20, %c0_21, %c0_22] : memref<1x1x128xf32, #tpu.memory_space<vmem>>, vector<1x1x128xf32>
    %60 = vector.shape_cast %59 : vector<1x1x128xf32> to vector<1x128xf32>
    %61 = vector.shape_cast %58 : vector<1x128xf32> to vector<1x1x128xf32>
    tpu.vector_store %arg3[%c0_20, %c0_21, %c0_22], %61 {strides = array<i32>} : memref<1x1x128xf32, #tpu.memory_space<vmem>>, vector<1x1x128xf32>,
    return
  }
  func.func @transform_0(%arg0: i32) -> (i32, i32, i32) {
    %c0_i32 = arith.constant 0 : i32
    %c0_i32_0 = arith.constant 0 : i32
    %c0_i32_1 = arith.constant 0 : i32
    return %arg0, %c0_i32, %c0_i32_0 : i32, i32, i32
  }
  func.func @transform_1(%arg0: i32) -> (i32, i32) {
    %c0_i32 = arith.constant 0 : i32
    %c0_i32_0 = arith.constant 0 : i32
    %c0_i32_1 = arith.constant 0 : i32
    return %c0_i32, %c0_i32_0 : i32, i32
  }
  func.func @transform_2(%arg0: i32) -> (i32, i32, i32) {
    %c0_i32 = arith.constant 0 : i32
    %c0_i32_0 = arith.constant 0 : i32
    %c0_i32_1 = arith.constant 0 : i32
    return %arg0, %c0_i32, %c0_i32_0 : i32, i32, i32
  }
}

</mosaic_0001>

<llo_original>
// kernel: gcn_forward_batched.1
$region0: #{gcn_forward_batched.1}
  #allocation0 [shape = 'u32[]', space=smem, size = 0x4, offset = 0x4, fixed_abs, tag = 'smem constant byte address 0x4 - core index']
  #allocation1 [shape = 'u32[144,128]{1,0:T(1,128)}', space=vmem, size = 0x12000, scoped, tag = 'internal scratch']
  %s0 = inlined_call_operand.vmem [shape: f32[1,5,8], index: 0, kind: input, shape index: {}]
  %s1 = inlined_call_operand.vmem [shape: f32[208,128], index: 1, kind: input, shape index: {}]
  %s2 = inlined_call_operand.vmem [shape: f32[1,1,128], index: 2, kind: output, shape index: {}]
  %s3 = sld [smem:[#allocation0]]
  $region18: #{gcn_forward_batched.1} parent=0
    _
  %s5 = ssub.s32 1, %s3
  %s6 = scalar_select 0, %s5, %s3
  // Predicated region
  $region2: #{gcn_forward_batched.1} parent=0 // pred_check
    _
  $region3: #{gcn_forward_batched.1} parent=0 // pred_check_branch
    %8 = sbr.rel (0) target = $region5
  $region4: #{gcn_forward_batched.1} parent=0 // pred_region
    _
  $region5: #{gcn_forward_batched.1} parent=0 // pred_fallthru
    _
  // Predicated region
  $region6: #{gcn_forward_batched.1} parent=0 // pred_check
    _
  $region7: #{gcn_forward_batched.1} parent=0 // pred_check_branch
    %10 = sbr.rel (0) target = $region9
  $region8: #{gcn_forward_batched.1} parent=0 // pred_region
    _
  $region9: #{gcn_forward_batched.1} parent=0 // pred_fallthru
    _
  %v11 = vld [vmem:[%s0] sm:$0x1f]
  %v12 = vld [vmem:[%s1] sm:$0xff]
  %vm13 = vcmask 64512
  %v15 = vsel %vm13, %v11, 0
  %17 = vmatprep.subr.mxu0 0.0
  %18 = vmatpush1.msra.mxu0 %v12
  %19 = vmatprep.subr.mxu0 0.0
  %20 = vmatpush1.msra.mxu0 0.0
  %21 = vmatprep.subr.mxu0 0.0
  %22 = vmatpush1.msra.mxu0 0.0
  %23 = vmatprep.subr.mxu0 0.0
  %24 = vmatpush1.msra.mxu0 0.0
  %25 = vmatprep.subr.mxu0 0.0
  %26 = vmatpush1.msra.mxu0 0.0
  %27 = vmatprep.subr.mxu0 0.0
  %28 = vmatpush1.msra.mxu0 0.0
  %29 = vmatprep.subr.mxu0 0.0
  %30 = vmatpush1.msra.mxu0 0.0
  %31 = vmatprep.subr.mxu0 0.0
  %32 = vmatpush1.msra.mxu0 0.0
  %33 = vmatprep.subr.mxu0 0.0
  %34 = vmatpush1.msra.mxu0 0.0
  %35 = vmatprep.subr.mxu0 0.0
  %36 = vmatpush1.msra.mxu0 0.0
  %37 = vmatprep.subr.mxu0 0.0
  %38 = vmatpush1.msra.mxu0 0.0
  %39 = vmatprep.subr.mxu0 0.0
  %40 = vmatpush1.msra.mxu0 0.0
  %41 = vmatprep.subr.mxu0 0.0
  %42 = vmatpush1.msra.mxu0 0.0
  %43 = vmatprep.subr.mxu0 0.0
  %44 = vmatpush1.msra.mxu0 0.0
  %45 = vmatprep.subr.mxu0 0.0
  %46 = vmatpush1.msra.mxu0 0.0
  %47 = vmatprep.subr.mxu0 0.0
  %48 = vmatpush1.msra.mxu0 0.0
  %49 = vmatprep.subr.mxu0 0.0
  %50 = vmatpush1.msra.mxu0 0.0
  %51 = vmatprep.subr.mxu0 0.0
  %52 = vmatpush1.msra.mxu0 0.0
  %53 = vmatprep.subr.mxu0 0.0
  %54 = vmatpush1.msra.mxu0 0.0
  %55 = vmatprep.subr.mxu0 0.0
  %56 = vmatpush1.msra.mxu0 0.0
  %57 = vmatprep.subr.mxu0 0.0
  %58 = vmatpush1.msra.mxu0 0.0
  %59 = vmatprep.subr.mxu0 0.0
  %60 = vmatpush1.msra.mxu0 0.0
  %61 = vmatprep.subr.mxu0 0.0
  %62 = vmatpush1.msra.mxu0 0.0
  %63 = vmatprep.subr.mxu0 0.0
  %64 = vmatpush1.msra.mxu0 0.0
  %65 = vmatprep.subr.mxu0 0.0
  %66 = vmatpush1.msra.mxu0 0.0
  %67 = vmatprep.subr.mxu0 0.0
  %68 = vmatpush1.msra.mxu0 0.0
  %69 = vmatprep.subr.mxu0 0.0
  %70 = vmatpush1.msra.mxu0 0.0
  %71 = vmatprep.subr.mxu0 0.0
  %72 = vmatpush1.msra.mxu0 0.0
  %73 = vmatprep.subr.mxu0 0.0
  %74 = vmatpush1.msra.mxu0 0.0
  %75 = vmatprep.subr.mxu0 0.0
  %76 = vmatpush1.msra.mxu0 0.0
  %77 = vmatprep.subr.mxu0 0.0
  %78 = vmatpush1.msra.mxu0 0.0
  %79 = vmatprep.subr.mxu0 0.0
  %80 = vmatpush1.msra.mxu0 0.0
  %81 = vmatprep.mubr.f32.mxu0 0.0
  %82 = vmatmul.mubr.f32.gmra.mrb[0].mxu0 %v15
  %v83 = vpop.f32.mrb[0].mxu0
  %v84 = vadd.f32 0.0, %v83
  %v85 = vpop.f32.mrb[0].mxu0
  %86 = vdwg.mxu0
  %vm87 = vcmask 1044480
  %v88 = vsel %vm87, %v84, 0.0
  %v89 = vrot.slane %v88, 4
  %v90 = vadd.f32 %v88, %v89
  %v91 = vrot.slane %v90, 2
  %v92 = vadd.f32 %v90, %v91
  %v93 = vrot.slane %v92, 1
  %v94 = vadd.f32 %v92, %v93
  %v95 = vsub.f32 %v94, %v84
  %v96 = vlaneseq
  %v97 = vshrl.u32 %v96, 7
  %vm98 = vcmp.eq.s32.totalorder %v97, 0
  %v99 = vmul.f32 %v95, 0.5
  %v100 = vmul.f32 %v84, 0.5
  %v101 = vlaneseq
  %v102 = vshrl.u32 %v101, 7
  %v103 = vsub.s32 0, %v102
  %v104 = vrot.slane %v99, %v103
  %v105 = vlaneseq
  %v106 = vshrl.u32 %v105, 7
  %v107 = vsub.s32 0, %v106
  %v108 = vrot.slane %v100, %v107
  %v109 = vsel %vm98, %v104, %v108
  %v110 = vld [vmem:[%s1 + $0xc8] sm:$0x1]
  %v111 = vlaneseq
  %v112 = vshrl.u32 %v111, 7
  %v113 = vsub.s32 0, %v112
  %v114 = vrot.slane %v110, %v113
  %v115 = vadd.f32 %v109, %v114
  %v116 = vmax.f32 %v115, 0.0
  %v117 = vld [vmem:[%s1 + $0x8] sm:$0xff]
  %v118 = vld [vmem:[%s1 + $0x10] sm:$0xff]
  %v119 = vld [vmem:[%s1 + $0x18] sm:$0xff]
  %v120 = vld [vmem:[%s1 + $0x20] sm:$0xff]
  %vm121 = vcmask 261120
  %v123 = vsel %vm121, %v116, 0
  %125 = vmatprep.subr.mxu0 0.0
  %126 = vmatpush1.msra.mxu0 %v117
  %127 = vmatprep.subr.mxu0 0.0
  %128 = vmatpush1.msra.mxu0 %v118
  %129 = vmatprep.subr.mxu0 0.0
  %130 = vmatpush1.msra.mxu0 %v119
  %131 = vmatprep.subr.mxu0 0.0
  %132 = vmatpush1.msra.mxu0 %v120
  %133 = vmatprep.subr.mxu0 0.0
  %134 = vmatpush1.msra.mxu0 0.0
  %135 = vmatprep.subr.mxu0 0.0
  %136 = vmatpush1.msra.mxu0 0.0
  %137 = vmatprep.subr.mxu0 0.0
  %138 = vmatpush1.msra.mxu0 0.0
  %139 = vmatprep.subr.mxu0 0.0
  %140 = vmatpush1.msra.mxu0 0.0
  %141 = vmatprep.subr.mxu0 0.0
  %142 = vmatpush1.msra.mxu0 0.0
  %143 = vmatprep.subr.mxu0 0.0
  %144 = vmatpush1.msra.mxu0 0.0
  %145 = vmatprep.subr.mxu0 0.0
  %146 = vmatpush1.msra.mxu0 0.0
  %147 = vmatprep.subr.mxu0 0.0
  %148 = vmatpush1.msra.mxu0 0.0
  %149 = vmatprep.subr.mxu0 0.0
  %150 = vmatpush1.msra.mxu0 0.0
  %151 = vmatprep.subr.mxu0 0.0
  %152 = vmatpush1.msra.mxu0 0.0
  %153 = vmatprep.subr.mxu0 0.0
  %154 = vmatpush1.msra.mxu0 0.0
  %155 = vmatprep.subr.mxu0 0.0
  %156 = vmatpush1.msra.mxu0 0.0
  %157 = vmatprep.subr.mxu0 0.0
  %158 = vmatpush1.msra.mxu0 0.0
  %159 = vmatprep.subr.mxu0 0.0
  %160 = vmatpush1.msra.mxu0 0.0
  %161 = vmatprep.subr.mxu0 0.0
  %162 = vmatpush1.msra.mxu0 0.0
  %163 = vmatprep.subr.mxu0 0.0
  %164 = vmatpush1.msra.mxu0 0.0
  %165 = vmatprep.subr.mxu0 0.0
  %166 = vmatpush1.msra.mxu0 0.0
  %167 = vmatprep.subr.mxu0 0.0
  %168 = vmatpush1.msra.mxu0 0.0
  %169 = vmatprep.subr.mxu0 0.0
  %170 = vmatpush1.msra.mxu0 0.0
  %171 = vmatprep.subr.mxu0 0.0
  %172 = vmatpush1.msra.mxu0 0.0
  %173 = vmatprep.subr.mxu0 0.0
  %174 = vmatpush1.msra.mxu0 0.0
  %175 = vmatprep.subr.mxu0 0.0
  %176 = vmatpush1.msra.mxu0 0.0
  %177 = vmatprep.subr.mxu0 0.0
  %178 = vmatpush1.msra.mxu0 0.0
  %179 = vmatprep.subr.mxu0 0.0
  %180 = vmatpush1.msra.mxu0 0.0
  %181 = vmatprep.subr.mxu0 0.0
  %182 = vmatpush1.msra.mxu0 0.0
  %183 = vmatprep.subr.mxu0 0.0
  %184 = vmatpush1.msra.mxu0 0.0
  %185 = vmatprep.subr.mxu0 0.0
  %186 = vmatpush1.msra.mxu0 0.0
  %187 = vmatprep.subr.mxu0 0.0
  %188 = vmatpush1.msra.mxu0 0.0
  %189 = vmatprep.mubr.f32.mxu0 0.0
  %190 = vmatmul.mubr.f32.gmra.mrb[0].mxu0 %v123
  %v191 = vpop.f32.mrb[0].mxu0
  %v192 = vadd.f32 0.0, %v191
  %v193 = vpop.f32.mrb[0].mxu0
  %194 = vdwg.mxu0
  %v195 = vsel %vm87, %v192, 0.0
  %v196 = vrot.slane %v195, 4
  %v197 = vadd.f32 %v195, %v196
  %v198 = vrot.slane %v197, 2
  %v199 = vadd.f32 %v197, %v198
  %v200 = vrot.slane %v199, 1
  %v201 = vadd.f32 %v199, %v200
  %v202 = vsub.f32 %v201, %v192
  %v203 = vmul.f32 %v202, 0.5
  %v204 = vmul.f32 %v192, 0.5
  %v205 = vlaneseq
  %v206 = vshrl.u32 %v205, 7
  %v207 = vsub.s32 0, %v206
  %v208 = vrot.slane %v203, %v207
  %v209 = vlaneseq
  %v210 = vshrl.u32 %v209, 7
  %v211 = vsub.s32 0, %v210
  %v212 = vrot.slane %v204, %v211
  %v213 = vsel %vm98, %v208, %v212
  %v214 = vld [vmem:[%s1 + $0xc9] sm:$0x1]
  %v215 = vlaneseq
  %v216 = vshrl.u32 %v215, 7
  %v217 = vsub.s32 0, %v216
  %v218 = vrot.slane %v214, %v217
  %v219 = vadd.f32 %v213, %v218
  %v220 = vmax.f32 %v219, 0.0
  %v222 = vrot.slane %v220, 1
  %223 = vrot.lane.b32.xlu0 %v222, 32
  %v224 = vpop.permute.xlu0 %223
  %v226 = vrot.slane %v220, 2
  %227 = vrot.lane.b32.xlu0 %v226, 64
  %v228 = vpop.permute.xlu0 %227
  %v230 = vrot.slane %v220, 3
  %231 = vrot.lane.b32.xlu0 %v230, 96
  %v232 = vpop.permute.xlu0 %231
  %v234 = vrot.slane %v220, 4
  %v235 = vsel %vm121, %v220, %v224
  %vm236 = vcmask 523264
  %v237 = vsel %vm236, %v235, %v228
  %vm238 = vcmask 785408
  %v239 = vsel %vm238, %v237, %v232
  %v240 = vld [vmem:[%s1 + $0x28] sm:$0xff]
  %v241 = vld [vmem:[%s1 + $0x30] sm:$0xff]
  %v242 = vld [vmem:[%s1 + $0x38] sm:$0xff]
  %v243 = vld [vmem:[%s1 + $0x40] sm:$0xff]
  %v244 = vld [vmem:[%s1 + $0x48] sm:$0xff]
  %v245 = vld [vmem:[%s1 + $0x50] sm:$0xff]
  %v246 = vld [vmem:[%s1 + $0x58] sm:$0xff]
  %v247 = vld [vmem:[%s1 + $0x60] sm:$0xff]
  %v248 = vld [vmem:[%s1 + $0x68] sm:$0xff]
  %v249 = vld [vmem:[%s1 + $0x70] sm:$0xff]
  %v250 = vld [vmem:[%s1 + $0x78] sm:$0xff]
  %v251 = vld [vmem:[%s1 + $0x80] sm:$0xff]
  %v252 = vld [vmem:[%s1 + $0x88] sm:$0xff]
  %v253 = vld [vmem:[%s1 + $0x90] sm:$0xff]
  %v254 = vld [vmem:[%s1 + $0x98] sm:$0xff]
  %v255 = vld [vmem:[%s1 + $0xa0] sm:$0xff]
  %v256 = vld [vmem:[%s1 + $0xa8] sm:$0xff]
  %v257 = vld [vmem:[%s1 + $0xb0] sm:$0xff]
  %v258 = vld [vmem:[%s1 + $0xb8] sm:$0xff]
  %v259 = vld [vmem:[%s1 + $0xc0] sm:$0xff]
  %v260 = vld [vmem:[%s1 + $0xca] sm:$0x1]
  %v261 = vsel %vm121, %v234, 0
  %263 = vmatprep.subr.mxu0 0.0
  %264 = vmatpush1.msra.mxu0 %v240
  %265 = vmatprep.subr.mxu0 0.0
  %266 = vmatpush1.msra.mxu0 %v241
  %267 = vmatprep.subr.mxu0 0.0
  %268 = vmatpush1.msra.mxu0 %v242
  %269 = vmatprep.subr.mxu0 0.0
  %270 = vmatpush1.msra.mxu0 %v243
  %271 = vmatprep.subr.mxu0 0.0
  %272 = vmatpush1.msra.mxu0 %v244
  %273 = vmatprep.subr.mxu0 0.0
  %274 = vmatpush1.msra.mxu0 %v245
  %275 = vmatprep.subr.mxu0 0.0
  %276 = vmatpush1.msra.mxu0 %v246
  %277 = vmatprep.subr.mxu0 0.0
  %278 = vmatpush1.msra.mxu0 %v247
  %279 = vmatprep.subr.mxu0 0.0
  %280 = vmatpush1.msra.mxu0 %v248
  %281 = vmatprep.subr.mxu0 0.0
  %282 = vmatpush1.msra.mxu0 %v249
  %283 = vmatprep.subr.mxu0 0.0
  %284 = vmatpush1.msra.mxu0 %v250
  %285 = vmatprep.subr.mxu0 0.0
  %286 = vmatpush1.msra.mxu0 %v251
  %287 = vmatprep.subr.mxu0 0.0
  %288 = vmatpush1.msra.mxu0 %v252
  %289 = vmatprep.subr.mxu0 0.0
  %290 = vmatpush1.msra.mxu0 %v253
  %291 = vmatprep.subr.mxu0 0.0
  %292 = vmatpush1.msra.mxu0 %v254
  %293 = vmatprep.subr.mxu0 0.0
  %294 = vmatpush1.msra.mxu0 %v255
  %295 = vmatprep.subr.mxu0 0.0
  %296 = vmatpush1.msra.mxu0 %v256
  %297 = vmatprep.subr.mxu0 0.0
  %298 = vmatpush1.msra.mxu0 %v257
  %299 = vmatprep.subr.mxu0 0.0
  %300 = vmatpush1.msra.mxu0 %v258
  %301 = vmatprep.subr.mxu0 0.0
  %302 = vmatpush1.msra.mxu0 %v259
  %303 = vmatprep.subr.mxu0 0.0
  %304 = vmatpush1.msra.mxu0 0.0
  %305 = vmatprep.subr.mxu0 0.0
  %306 = vmatpush1.msra.mxu0 0.0
  %307 = vmatprep.subr.mxu0 0.0
  %308 = vmatpush1.msra.mxu0 0.0
  %309 = vmatprep.subr.mxu0 0.0
  %310 = vmatpush1.msra.mxu0 0.0
  %311 = vmatprep.subr.mxu0 0.0
  %312 = vmatpush1.msra.mxu0 0.0
  %313 = vmatprep.subr.mxu0 0.0
  %314 = vmatpush1.msra.mxu0 0.0
  %315 = vmatprep.subr.mxu0 0.0
  %316 = vmatpush1.msra.mxu0 0.0
  %317 = vmatprep.subr.mxu0 0.0
  %318 = vmatpush1.msra.mxu0 0.0
  %319 = vmatprep.subr.mxu0 0.0
  %320 = vmatpush1.msra.mxu0 0.0
  %321 = vmatprep.subr.mxu0 0.0
  %322 = vmatpush1.msra.mxu0 0.0
  %323 = vmatprep.subr.mxu0 0.0
  %324 = vmatpush1.msra.mxu0 0.0
  %325 = vmatprep.subr.mxu0 0.0
  %326 = vmatpush1.msra.mxu0 0.0
  %327 = vmatprep.mubr.f32.mxu0 %v261
  %328 = vmatmul.mubr.f32.gmra.mrb[0].mxu0 %v239
  %v329 = vpop.f32.mrb[0].mxu0
  %v330 = vadd.f32 %v260, %v329
  %v331 = vpop.f32.mrb[0].mxu0
  %332 = vdwg.mxu0
  %333 = vst [vmem:[%s2] sm:$0x1] %v330
  // Predicated region
  $region10: #{gcn_forward_batched.1} parent=0 // pred_check
    _
  $region11: #{gcn_forward_batched.1} parent=0 // pred_check_branch
    %335 = sbr.rel (0) target = $region13
  $region12: #{gcn_forward_batched.1} parent=0 // pred_region
    _
  $region13: #{gcn_forward_batched.1} parent=0 // pred_fallthru
    _
  // Predicated region
  $region14: #{gcn_forward_batched.1} parent=0 // pred_check
    _
  $region15: #{gcn_forward_batched.1} parent=0 // pred_check_branch
    %337 = sbr.rel (0) target = $region17
  $region16: #{gcn_forward_batched.1} parent=0 // pred_region
    _
  $region17: #{gcn_forward_batched.1} parent=0 // pred_fallthru
    _

</llo_original>
